<compile_context>
chip_gen: v7x
topology: tpu7x:2x2x1
jax: 0.10.0
libtpu: 0.0.40
codegen_flags: <defaults>
</compile_context>

<pallas_src>
import functools
import math

import jax
import jax.numpy as jnp
from jax import lax
from jax.experimental import pallas as pl
from jax.experimental.pallas import tpu as pltpu

_LANE = 128
_SUBLANE = 8


def _round_up(x, m):
    return (x + m - 1) // m * m


def _divisors_desc(n):
    return [d for d in range(n, 0, -1) if n % d == 0]


def _vmem_capacity_bytes():
    try:
        return int(pltpu.get_tpu_info().vmem_capacity_bytes)
    except Exception:
        return 64 * 1024 * 1024  # conservative default (v7x per-TensorCore VMEM)


def _vmem_limit(needed_bytes, cap_bytes):
    # Raise the scoped-VMEM limit above the 16/32 MiB defaults when needed,
    # with headroom, but never above physical capacity.
    return int(max(min(cap_bytes, needed_bytes + (8 << 20)), 32 << 20))


# ---------------------------------------------------------------------------
# Fused normalize pre-pass (z1 and z2 in one call) + trace(sim) partials.
# ---------------------------------------------------------------------------
def _normalize_pair_kernel(z1_ref, z2_ref, z1o_ref, z2o_ref, tr_ref, *, inv_temp):
    z1 = z1_ref[...].astype(jnp.float32)
    z2 = z2_ref[...].astype(jnp.float32)
    # rsqrt on the clamped squared norm (EUP path; no divide). Equivalent to
    # z / max(||z||, 1e-12); zero (padded) rows map to exact zeros.
    s1 = jnp.float32(inv_temp) * lax.rsqrt(
        jnp.maximum(jnp.sum(z1 * z1, axis=1, keepdims=True), jnp.float32(1e-24)))
    s2 = lax.rsqrt(
        jnp.maximum(jnp.sum(z2 * z2, axis=1, keepdims=True), jnp.float32(1e-24)))
    z1n = (z1 * s1).astype(z1o_ref.dtype)
    z2n = (z2 * s2).astype(z2o_ref.dtype)
    z1o_ref[...] = z1n
    z2o_ref[...] = z2n
    # Per-row-block partial of trace(sim), computed on the same (possibly bf16)
    # values the MXU will consume; padded rows contribute exactly 0.
    tr_ref[0, 0] = jnp.sum(z1n.astype(jnp.float32) * z2n.astype(jnp.float32))


# ---------------------------------------------------------------------------
# Main B x B tile kernel: one scalar softplus-partial per (i, j) tile.
# ---------------------------------------------------------------------------
def _ntxent_tile_kernel(z1_ref, z2_ref, out_ref):
    # (tile_m, Dp) x (tile_n, Dp)^T on the MXU, f32 accumulation; 1/temperature
    # is already folded into z1's row scale.
    sim = lax.dot_general(
        z1_ref[...], z2_ref[...],
        dimension_numbers=(((1,), (1,)), ((), ())),
        preferred_element_type=jnp.float32,
    )
    # Stable BCE-with-logits with labels == I folded out (trace handled in the
    # wrapper):  sum_ij [max(x, 0) + log1p(exp(-|x|))].
    # (If profiling on v6e/v7x shows the EUP slot binding for small D, the
    #  exp/log1p here could be done in bf16 with an f32 sum — kept f32 here.)
    per_elem = jnp.maximum(sim, 0.0) + jnp.log1p(jnp.exp(-jnp.abs(sim)))
    out_ref[0, 0] = jnp.sum(per_elem)


# ---------------------------------------------------------------------------
# VMEM-aware tile selection.
# ---------------------------------------------------------------------------
def _pick_tiles(B, Dp, op_bytes, vmem_budget, tile_m_cap=1024, tile_n_cap=512):
    # Pad granule: 8 sublanes for small B, 128 for large B (keeps Bp close to B
    # so padding waste stays bounded even with big tiles).
    base = _SUBLANE if B <= _LANE else _LANE
    Bp = _round_up(B, base)
    nblk = Bp // base

    def fits(tm, tn):
        # 2 pipeline buffers per streamed input block + f32 sim/softplus temps.
        return (2 * (tm + tn) * Dp * op_bytes + 3 * tm * tn * 4) <= vmem_budget

    tile_m = base
    for d in _divisors_desc(nblk):
        cand = d * base
        if cand <= tile_m_cap and fits(cand, base):
            tile_m = cand
            break
    tile_n = base
    for d in _divisors_desc(nblk):
        cand = d * base
        if cand <= tile_n_cap and fits(tile_m, cand):
            tile_n = cand
            break
    return Bp, tile_m, tile_n


def ntxent_loss(z1, z2, temperature=0.5, *, matmul_dtype=jnp.bfloat16,
                tile_m=None, tile_n=None):
    """Pallas NTXentLoss.forward. z1, z2: [B, D] -> scalar loss (f32).

    matmul_dtype defaults to bfloat16 (MXU-native, f32 accumulation); pass
    jnp.float32 for tight-tolerance operands.  Note that 1/temperature is
    folded into z1 before the cast, so very small temperatures amplify bf16
    quantization of sim (fine for a loss value; use f32 operands otherwise).
    """
    assert z1.ndim == 2 and z1.shape == z2.shape
    B, D = z1.shape
    Dp = _round_up(D, _LANE)
    op_bytes = jnp.dtype(matmul_dtype).itemsize
    in_bytes = z1.dtype.itemsize

    vmem_cap = _vmem_capacity_bytes()
    if tile_m is None or tile_n is None:
        Bp, tm, tn = _pick_tiles(B, Dp, op_bytes, int(0.7 * vmem_cap))
    else:
        tm, tn = int(tile_m), int(tile_n)
        assert tm % _SUBLANE == 0 and tn % _SUBLANE == 0 and tm > 0 and tn > 0
        Bp = _round_up(B, math.lcm(tm, tn))
    grid_i, grid_j = Bp // tm, Bp // tn

    # Row block for the (mem-bound) normalize pre-pass: largest multiple of 8
    # dividing Bp that is <= 512 and fits the VMEM budget.
    norm_tile = _SUBLANE
    for d in _divisors_desc(Bp // _SUBLANE):
        cand = d * _SUBLANE
        if cand <= 512 and (4 * (in_bytes + op_bytes) + 12) * cand * Dp <= int(0.7 * vmem_cap):
            norm_tile = cand
            break
    norm_grid = Bp // norm_tile

    if Bp != B or Dp != D:
        pad = ((0, Bp - B), (0, Dp - D))
        z1p = jnp.pad(z1, pad)
        z2p = jnp.pad(z2, pad)
    else:
        z1p, z2p = z1, z2

    needed_norm = (4 * (in_bytes + op_bytes) + 12) * norm_tile * Dp
    needed_main = 2 * (tm + tn) * Dp * op_bytes + 3 * tm * tn * 4

    # --- Pass 1: fused normalize (1/T folded into z1) + trace partials. ------
    z1n, z2n, tr_parts = pl.pallas_call(
        functools.partial(_normalize_pair_kernel,
                          inv_temp=1.0 / float(temperature)),
        out_shape=(
            jax.ShapeDtypeStruct((Bp, Dp), matmul_dtype),
            jax.ShapeDtypeStruct((Bp, Dp), matmul_dtype),
            jax.ShapeDtypeStruct((norm_grid, 1), jnp.float32),
        ),
        grid=(norm_grid,),
        in_specs=[pl.BlockSpec((norm_tile, Dp), lambda i: (i, 0)),
                  pl.BlockSpec((norm_tile, Dp), lambda i: (i, 0))],
        out_specs=(
            pl.BlockSpec((norm_tile, Dp), lambda i: (i, 0)),
            pl.BlockSpec((norm_tile, Dp), lambda i: (i, 0)),
            pl.BlockSpec((1, 1), lambda i: (i, 0),
                         memory_space=pltpu.MemorySpace.SMEM),
        ),
        compiler_params=pltpu.CompilerParams(
            dimension_semantics=("parallel",),
            vmem_limit_bytes=_vmem_limit(needed_norm, vmem_cap)),
    )(z1p, z2p)

    # --- Pass 2: tiled similarity + stable softplus partials. ----------------
    partials = pl.pallas_call(
        _ntxent_tile_kernel,
        out_shape=jax.ShapeDtypeStruct((grid_i, grid_j), jnp.float32),
        grid=(grid_i, grid_j),
        in_specs=[pl.BlockSpec((tm, Dp), lambda i, j: (i, 0)),
                  pl.BlockSpec((tn, Dp), lambda i, j: (j, 0))],
        out_specs=pl.BlockSpec((1, 1), lambda i, j: (i, j),
                               memory_space=pltpu.MemorySpace.SMEM),
        compiler_params=pltpu.CompilerParams(
            dimension_semantics=("parallel", "parallel"),
            vmem_limit_bytes=_vmem_limit(needed_main, vmem_cap)),
    )(z1n, z2n)

    # sum_ij [max(x,0) - x*I + log1p(exp(-|x|))]
    #   = sum_ij [max(x,0) + log1p(exp(-|x|))] - trace(sim)
    total = jnp.sum(partials, dtype=jnp.float32) - jnp.sum(tr_parts, dtype=jnp.float32)
    # Padded rows/cols normalize to exact zeros -> sim == 0 there -> each padded
    # element contributes exactly log1p(exp(0)) = log(2). Remove in closed form.
    n_pad_elems = Bp * Bp - B * B
    if n_pad_elems:
        total = total - jnp.float32(n_pad_elems) * jnp.float32(math.log(2.0))
    return total / jnp.float32(B * B)


def _reference(z1, z2, temperature):
    z1n = z1 / jnp.maximum(jnp.linalg.norm(z1, axis=1, keepdims=True), 1e-12)
    z2n = z2 / jnp.maximum(jnp.linalg.norm(z2, axis=1, keepdims=True), 1e-12)
    sim = (z1n @ z2n.T) / temperature
    labels = jnp.eye(z1.shape[0], dtype=jnp.float32)
    return jnp.mean(jnp.maximum(sim, 0.0) - sim * labels
                    + jnp.log1p(jnp.exp(-jnp.abs(sim))))


if __name__ == "__main__":
    key = jax.random.PRNGKey(0)
    k1, k2, k3, k4, k5, k6 = jax.random.split(key, 6)

    # Case 1: small single-tile path (B=8, D=32 -> Dp=128), f32 operands.
    B, D = 8, 32
    z1 = jax.random.normal(k1, (B, D), dtype=jnp.float32)
    z2 = jax.random.normal(k2, (B, D), dtype=jnp.float32)
    loss = ntxent_loss(z1, z2, temperature=0.5, matmul_dtype=jnp.float32)
    jax.block_until_ready(loss)
    ref = _reference(z1, z2, 0.5)
    assert jnp.allclose(loss, ref, atol=1e-5, rtol=1e-5), (loss, ref)

    # Case 2: multi-tile grid, asymmetric tiles + batch padding
    # (B=20 -> Bp=32, tile_m=16, tile_n=8), f32 operands.
    B2, D2 = 20, 48
    w1 = jax.random.normal(k3, (B2, D2), dtype=jnp.float32)
    w2 = jax.random.normal(k4, (B2, D2), dtype=jnp.float32)
    loss2 = ntxent_loss(w1, w2, temperature=0.5, matmul_dtype=jnp.float32,
                        tile_m=16, tile_n=8)
    jax.block_until_ready(loss2)
    ref2 = _reference(w1, w2, 0.5)
    assert jnp.allclose(loss2, ref2, atol=1e-5, rtol=1e-5), (loss2, ref2)

    # Case 3: default bf16 MXU operands (f32 accumulation), looser tolerance.
    loss3 = ntxent_loss(z1, z2, temperature=0.5)
    jax.block_until_ready(loss3)
    assert jnp.allclose(loss3, ref, atol=2e-2, rtol=2e-2), (loss3, ref)

    # Case 4: auto-picked tiles on the 128-granule path (B=160 -> Bp=256), f32.
    B3, D3 = 160, 96
    v1 = jax.random.normal(k5, (B3, D3), dtype=jnp.float32)
    v2 = jax.random.normal(k6, (B3, D3), dtype=jnp.float32)
    loss4 = ntxent_loss(v1, v2, temperature=0.5, matmul_dtype=jnp.float32)
    jax.block_until_ready(loss4)
    ref4 = _reference(v1, v2, 0.5)
    assert jnp.allclose(loss4, ref4, atol=1e-3, rtol=1e-3), (loss4, ref4)

    print("KERNEL_OK")
</pallas_src>

<mosaic_0001>
module attributes {stable_mosaic.version = 11 : i64} {
  func.func @_normalize_pair_kernel(%arg0: i32, %arg1: memref<8x128xf32, #tpu.memory_space<vmem>>, %arg2: memref<8x128xf32, #tpu.memory_space<vmem>>, %arg3: memref<8x128xf32, #tpu.memory_space<vmem>>, %arg4: memref<8x128xf32, #tpu.memory_space<vmem>>, %arg5: memref<1x1xf32, #tpu.memory_space<smem>>) attributes {dimension_semantics = [#tpu.dimension_semantics<parallel>], iteration_bounds = array<i64: 1>, scalar_prefetch = 0 : i64, scratch_operands = 0 : i64, tpu.core_type = #tpu.core_type<tc>, window_params = [{transform_indices = @transform_0, window_bounds = array<i64: 8, 128>}, {transform_indices = @transform_1, window_bounds = array<i64: 8, 128>}, {transform_indices = @transform_2, window_bounds = array<i64: 8, 128>}, {transform_indices = @transform_3, window_bounds = array<i64: 8, 128>}, {transform_indices = @transform_4, window_bounds = array<i64: 1, 1>}]} {
    %c0 = arith.constant 0 : index
    %c0_0 = arith.constant 0 : index
    %0 = vector.load %arg1[%c0, %c0_0] : memref<8x128xf32, #tpu.memory_space<vmem>>, vector<8x128xf32>
    %c0_1 = arith.constant 0 : index
    %c0_2 = arith.constant 0 : index
    %1 = vector.load %arg2[%c0_1, %c0_2] : memref<8x128xf32, #tpu.memory_space<vmem>>, vector<8x128xf32>
    %2 = arith.mulf %0, %0 : vector<8x128xf32>
    %cst = arith.constant dense<0.000000e+00> : vector<8xf32>
    %3 = vector.multi_reduction <add>, %2, %cst [1] : vector<8x128xf32> to vector<8xf32>
    %4 = vector.shape_cast %3 : vector<8xf32> to vector<8x1xf32>
    %cst_3 = arith.constant 1.000000e-24 : f32
    %5 = vector.broadcast %cst_3 : f32 to vector<8x1xf32>
    %6 = arith.maximumf %4, %5 : vector<8x1xf32>
    %7 = math.rsqrt %6 : vector<8x1xf32>
    %cst_4 = arith.constant 2.000000e+00 : f32
    %8 = vector.broadcast %cst_4 : f32 to vector<8x1xf32>
    %9 = arith.mulf %8, %7 : vector<8x1xf32>
    %10 = arith.mulf %1, %1 : vector<8x128xf32>
    %cst_5 = arith.constant dense<0.000000e+00> : vector<8xf32>
    %11 = vector.multi_reduction <add>, %10, %cst_5 [1] : vector<8x128xf32> to vector<8xf32>
    %12 = vector.shape_cast %11 : vector<8xf32> to vector<8x1xf32>
    %cst_6 = arith.constant 1.000000e-24 : f32
    %13 = vector.broadcast %cst_6 : f32 to vector<8x1xf32>
    %14 = arith.maximumf %12, %13 : vector<8x1xf32>
    %15 = math.rsqrt %14 : vector<8x1xf32>
    %16 = vector.broadcast %9 : vector<8x1xf32> to vector<8x128xf32>
    %17 = arith.mulf %0, %16 : vector<8x128xf32>
    %18 = vector.broadcast %15 : vector<8x1xf32> to vector<8x128xf32>
    %19 = arith.mulf %1, %18 : vector<8x128xf32>
    %c0_7 = arith.constant 0 : index
    %c0_8 = arith.constant 0 : index
    %20 = vector.load %arg3[%c0_7, %c0_8] : memref<8x128xf32, #tpu.memory_space<vmem>>, vector<8x128xf32>
    tpu.vector_store %arg3[%c0_7, %c0_8], %17 {strides = array<i32>} : memref<8x128xf32, #tpu.memory_space<vmem>>, vector<8x128xf32>,
    %c0_9 = arith.constant 0 : index
    %c0_10 = arith.constant 0 : index
    %21 = vector.load %arg4[%c0_9, %c0_10] : memref<8x128xf32, #tpu.memory_space<vmem>>, vector<8x128xf32>
    tpu.vector_store %arg4[%c0_9, %c0_10], %19 {strides = array<i32>} : memref<8x128xf32, #tpu.memory_space<vmem>>, vector<8x128xf32>,
    %22 = arith.mulf %17, %19 : vector<8x128xf32>
    %23 = vector.shape_cast %22 : vector<8x128xf32> to vector<1x8x128xf32>
    %cst_11 = arith.constant dense<0.000000e+00> : vector<1xf32>
    %24 = vector.multi_reduction <add>, %23, %cst_11 [1, 2] : vector<1x8x128xf32> to vector<1xf32>
    %25 = vector.shape_cast %24 : vector<1xf32> to vector<1x1x1xf32>
    %26 = vector.extract %25[0, 0, 0] : f32 from vector<1x1x1xf32>
    %c0_12 = arith.constant 0 : index
    %c0_13 = arith.constant 0 : index
    %27 = memref.load %arg5[%c0_12, %c0_13] : memref<1x1xf32, #tpu.memory_space<smem>>
    memref.store %26, %arg5[%c0_12, %c0_13] : memref<1x1xf32, #tpu.memory_space<smem>>
    return
  }
  func.func @transform_0(%arg0: i32) -> (i32, i32) {
    %c0_i32 = arith.constant 0 : i32
    %c0_i32_0 = arith.constant 0 : i32
    return %arg0, %c0_i32 : i32, i32
  }
  func.func @transform_1(%arg0: i32) -> (i32, i32) {
    %c0_i32 = arith.constant 0 : i32
    %c0_i32_0 = arith.constant 0 : i32
    return %arg0, %c0_i32 : i32, i32
  }
  func.func @transform_2(%arg0: i32) -> (i32, i32) {
    %c0_i32 = arith.constant 0 : i32
    %c0_i32_0 = arith.constant 0 : i32
    return %arg0, %c0_i32 : i32, i32
  }
  func.func @transform_3(%arg0: i32) -> (i32, i32) {
    %c0_i32 = arith.constant 0 : i32
    %c0_i32_0 = arith.constant 0 : i32
    return %arg0, %c0_i32 : i32, i32
  }
  func.func @transform_4(%arg0: i32) -> (i32, i32) {
    %c0_i32 = arith.constant 0 : i32
    %c0_i32_0 = arith.constant 0 : i32
    return %arg0, %c0_i32 : i32, i32
  }
}

</mosaic_0001>

<llo_original>
// kernel: tpu_custom_call.1
$region0: #{tpu_custom_call.1}
  #allocation0 [shape = 'u32[]', space=smem, size = 0x4, offset = 0x4, fixed_abs, tag = 'smem constant byte address 0x4 - core index']
  #allocation1 [shape = 'u32[144,128]{1,0:T(1,128)}', space=vmem, size = 0x12000, scoped, tag = 'internal scratch']
  %s0 = inlined_call_operand.hbm [shape: f32[8,128], index: 0, kind: input, shape index: {}]
  %s1 = inlined_call_operand.hbm [shape: f32[8,128], index: 1, kind: input, shape index: {}]
  %s2 = inlined_call_operand.hbm [shape: f32[8,128], index: 2, kind: output, shape index: {0}]
  %s3 = inlined_call_operand.hbm [shape: f32[8,128], index: 3, kind: output, shape index: {1}]
  %s4 = inlined_call_operand.hbm [shape: f32[1,1], index: 4, kind: output, shape index: {2}]
  %5 = xla_tuple %s2, %s3, %s4
  %s6 = sld [smem:[#allocation0]]
  $region42: #{tpu_custom_call.1} parent=0
    _
  %s8 = ssub.s32 1, %s6
  %s9 = scalar_select 0, %s8, %s6
  $region1: #{tpu_custom_call.1} parent=0
    #allocation2 [shape = 'u8[4096]{0}', space=vmem, size = 0x1000, scoped, tag = 'input window, operand 0, single buffered']
    #allocation3 [shape = 's32[1]{0}', space=sflag, size = 0x4, scoped, tag = 'scoped memory for tpu_custom_call.1']
    #allocation4 [shape = 's32[1]{0}', space=sflag, size = 0x4, scoped, tag = 'scoped memory for tpu_custom_call.1']
    #allocation5 [shape = 's32[1]{0}', space=sflag, size = 0x4, scoped, tag = 'scoped memory for tpu_custom_call.1']
    #allocation6 [shape = 'u8[4096]{0}', space=vmem, size = 0x1000, scoped, tag = 'input window, operand 1, single buffered']
    #allocation7 [shape = 's32[1]{0}', space=sflag, size = 0x4, scoped, tag = 'scoped memory for tpu_custom_call.1']
    #allocation8 [shape = 'u8[4096]{0}', space=vmem, size = 0x1000, scoped, tag = 'output window, operand 0, single buffered']
    #allocation9 [shape = 'u8[4096]{0}', space=vmem, size = 0x1000, scoped, tag = 'output window, operand 1, single buffered']
    #allocation10 [shape = 's32[1]{0}', space=sflag, size = 0x4, scoped, tag = 'scoped memory for tpu_custom_call.1']
    #allocation11 [shape = 'u8[512]{0}', space=smem, size = 0x200, scoped, tag = 'output window, operand 2, single buffered']
    %10 = vsyncpa [#allocation3], 0
    %11 = vsyncpa [#allocation7], 0
    %12 = vsyncpa [#allocation4], 0
    %13 = vsyncpa [#allocation10], 0
    %14 = vsyncpa [#allocation5], 0
    // Predicated region
    $region2: #{tpu_custom_call.1} parent=1 // pred_check
      _
    $region3: #{tpu_custom_call.1} parent=1 // pred_check_branch
      %16 = sbr.rel (0) target = $region5
    $region4: #{tpu_custom_call.1} parent=1 // pred_region
      %s18 = ssub.s32 128, 128
      %19 = vsyncadd [#allocation3], %s18
      %s21 = sshll.u32 [#allocation2], 4
      %s22 = int_to_ptr.vmem [resolvable:$true] %s21
      %24 = dma.hbm_to_vmem [thread:$0]  %s0, 128, %s22, [#allocation3]
    $region5: #{tpu_custom_call.1} parent=1 // pred_fallthru
      _
    // Predicated region
    $region6: #{tpu_custom_call.1} parent=1 // pred_check
      _
    $region7: #{tpu_custom_call.1} parent=1 // pred_check_branch
      %26 = sbr.rel (0) target = $region9
    $region8: #{tpu_custom_call.1} parent=1 // pred_region
      %s28 = ssub.s32 128, 128
      %29 = vsyncadd [#allocation7], %s28
      %s31 = sshll.u32 [#allocation6], 4
      %s32 = int_to_ptr.vmem [resolvable:$true] %s31
      %34 = dma.hbm_to_vmem [thread:$0]  %s1, 128, %s32, [#allocation7]
    $region9: #{tpu_custom_call.1} parent=1 // pred_fallthru
      _
    // Predicated region
    $region10: #{tpu_custom_call.1} parent=1 // pred_check
      _
    $region11: #{tpu_custom_call.1} parent=1 // pred_check_branch
      %36 = sbr.rel (0) target = $region13
    $region12: #{tpu_custom_call.1} parent=1 // pred_region
      %37 = dma.done [#allocation3], 128
    $region13: #{tpu_custom_call.1} parent=1 // pred_fallthru
      _
    // Predicated region
    $region14: #{tpu_custom_call.1} parent=1 // pred_check
      _
    $region15: #{tpu_custom_call.1} parent=1 // pred_check_branch
      %39 = sbr.rel (0) target = $region17
    $region16: #{tpu_custom_call.1} parent=1 // pred_region
      %40 = dma.done [#allocation7], 128
    $region17: #{tpu_custom_call.1} parent=1 // pred_fallthru
      _
    %v41 = vld [vmem:[#allocation2] sm:$0xff]
    %v42 = vld [vmem:[#allocation6] sm:$0xff]
    %v43 = vmul.f32 %v41, %v41
    %44 = vadd.xlane.f32.xlu0 %v43
    %v45 = vpop.xlane.xlu0 %44
    %v46 = vmax.f32 %v45, 1e-24
    %v47 = vrsqrt.pop %v46
    %v48 = vmul.f32 %v47, 2.0
    %v49 = vmul.f32 %v42, %v42
    %50 = vadd.xlane.f32.xlu0 %v49
    %v51 = vpop.xlane.xlu0 %50
    %v52 = vmax.f32 %v51, 1e-24
    %v53 = vrsqrt.pop %v52
    %v54 = vmul.f32 %v41, %v48
    %v55 = vmul.f32 %v42, %v53
    %56 = vst [vmem:[#allocation8] sm:$0xff] %v54
    %57 = vst [vmem:[#allocation9] sm:$0xff] %v55
    %v58 = vmul.f32 %v54, %v55
    %59 = vadd.xlane.f32.xlu0 %v58
    %v60 = vpop.xlane.xlu0 %59
    %v61 = vrot.slane %v60, 4
    %v62 = vadd.f32 %v60, %v61
    %v63 = vrot.slane %v62, 2
    %v64 = vadd.f32 %v62, %v63
    %v65 = vrot.slane %v64, 1
    %v66 = vadd.f32 %v64, %v65
    %s67 = vtos %v66
    %s68 = scalar_lea.smem [#allocation11], 0
    %69 = sst [smem:[%s68]] %s67
    // Predicated region
    $region18: #{tpu_custom_call.1} parent=1 // pred_check
      _
    $region19: #{tpu_custom_call.1} parent=1 // pred_check_branch
      %71 = sbr.rel (0) target = $region21
    $region20: #{tpu_custom_call.1} parent=1 // pred_region
      %s73 = ssub.s32 128, 128
      %74 = vsyncadd [#allocation4], %s73
      %s76 = sshll.u32 [#allocation8], 4
      %s77 = int_to_ptr.vmem [resolvable:$true] %s76
      %79 = dma.vmem_to_hbm [thread:$0]  %s77, 128, %s2, [#allocation4]
    $region21: #{tpu_custom_call.1} parent=1 // pred_fallthru
      _
    // Predicated region
    $region22: #{tpu_custom_call.1} parent=1 // pred_check
      _
    $region23: #{tpu_custom_call.1} parent=1 // pred_check_branch
      %81 = sbr.rel (0) target = $region25
    $region24: #{tpu_custom_call.1} parent=1 // pred_region
      %s83 = ssub.s32 128, 128
      %84 = vsyncadd [#allocation10], %s83
      %s86 = sshll.u32 [#allocation9], 4
      %s87 = int_to_ptr.vmem [resolvable:$true] %s86
      %89 = dma.vmem_to_hbm [thread:$0]  %s87, 128, %s3, [#allocation10]
    $region25: #{tpu_custom_call.1} parent=1 // pred_fallthru
      _
    // Predicated region
    $region26: #{tpu_custom_call.1} parent=1 // pred_check
      _
    $region27: #{tpu_custom_call.1} parent=1 // pred_check_branch
      %91 = sbr.rel (0) target = $region29
    $region28: #{tpu_custom_call.1} parent=1 // pred_region
      %s93 = ssub.s32 16, 16
      %94 = vsyncadd [#allocation5], %s93
      %97 = dma.smem_to_hbm [#allocation11], 16, %s4, [#allocation5]
    $region29: #{tpu_custom_call.1} parent=1 // pred_fallthru
      _
    // Predicated region
    $region30: #{tpu_custom_call.1} parent=1 // pred_check
      _
    $region31: #{tpu_custom_call.1} parent=1 // pred_check_branch
      %99 = sbr.rel (0) target = $region33
    $region32: #{tpu_custom_call.1} parent=1 // pred_region
      %100 = dma.done [#allocation4], 128
    $region33: #{tpu_custom_call.1} parent=1 // pred_fallthru
      _
    // Predicated region
    $region34: #{tpu_custom_call.1} parent=1 // pred_check
      _
    $region35: #{tpu_custom_call.1} parent=1 // pred_check_branch
      %102 = sbr.rel (0) target = $region37
    $region36: #{tpu_custom_call.1} parent=1 // pred_region
      %103 = dma.done [#allocation10], 128
    $region37: #{tpu_custom_call.1} parent=1 // pred_fallthru
      _
    // Predicated region
    $region38: #{tpu_custom_call.1} parent=1 // pred_check
      _
    $region39: #{tpu_custom_call.1} parent=1 // pred_check_branch
      %105 = sbr.rel (0) target = $region41
    $region40: #{tpu_custom_call.1} parent=1 // pred_region
      %106 = dma.done [#allocation5], 16
    $region41: #{tpu_custom_call.1} parent=1 // pred_fallthru
      _
    %107 = sfence
    %108 = vsyncpa [#allocation3], 1
    %109 = vsyncpa [#allocation7], 1
    %110 = vsyncpa [#allocation4], 1
    %111 = vsyncpa [#allocation10], 1
    %112 = vsyncpa [#allocation5], 1

</llo_original>
